<compile_context>
chip_gen: v6e
topology: v6e:2x2x1
jax: 0.10.0
libtpu: 0.0.40
codegen_flags: <defaults>
</compile_context>

<pallas_src>
import jax
import jax.numpy as jnp
import numpy as np
from jax.experimental import pallas as pl
from jax.experimental.pallas import tpu as pltpu

_LANES = 128
_SUBLANES = 8
_MAX_TILE_ROWS = 8192          # 8192 x 128 x 4 B = 4 MiB per f32 input tile
_CHUNK_ROWS = 512              # in-kernel chunk (bounds unrolled code size)
_VMEM_LIMIT_BYTES = 40 * 1024 * 1024   # > 2 inputs x 2 bufs x 4 MiB, < every chip's VMEM
_PALLAS_MIN_ELEMS = 1 << 16    # below this, fused XLA elementwise+reduce wins


def _joint_loss_kernel(pred_ref, target_ref, sq_ref, abs_ref):
    """Accumulates per-lane sum(d^2) and sum(|d|) into the (8,128) output blocks."""
    j = pl.program_id(1)  # reduction axis (last grid axis)

    @pl.when(j == 0)
    def _():
        sq_ref[...] = jnp.zeros_like(sq_ref)
        abs_ref[...] = jnp.zeros_like(abs_ref)

    tile_rows = pred_ref.shape[0]

    def accum(start, nrows):
        p = pred_ref[pl.ds(start, nrows), :].astype(jnp.float32)
        t = target_ref[pl.ds(start, nrows), :].astype(jnp.float32)
        d = (p - t).reshape(nrows // _SUBLANES, _SUBLANES, _LANES)
        # axis-0 fold is pure VPU (vreg adds); no cross-lane XLU reduce in the hot loop.
        sq_ref[...] += (d * d).sum(axis=0)
        abs_ref[...] += jnp.abs(d).sum(axis=0)

    n_full = tile_rows // _CHUNK_ROWS
    rem = tile_rows % _CHUNK_ROWS

    if n_full > 0:
        @pl.loop(0, n_full)
        def _(c):
            accum(pl.multiple_of(c * _CHUNK_ROWS, _CHUNK_ROWS), _CHUNK_ROWS)

    if rem > 0:
        accum(n_full * _CHUNK_ROWS, rem)


def _round_up(x, m):
    return ((x + m - 1) // m) * m


def _row_granularity(dtype):
    """Min sublane granularity for packed dtypes: f32->8, bf16->16, int8/fp8->32."""
    return {4: 8, 2: 16, 1: 32}.get(jnp.dtype(dtype).itemsize, 8)


def _num_tensorcores() -> int:
    # TODO(synk): no portable JAX query for TensorCores-per-device; default to 1.
    try:
        return max(1, int(getattr(jax.devices()[0], "num_cores", 1)))
    except Exception:
        return 1


def _loss_joint_xla(pred, target, w):
    diff = pred.astype(jnp.float32) - target.astype(jnp.float32)
    return w[0] * jnp.mean(diff * diff) + w[1] * jnp.mean(jnp.abs(diff))


def loss_joint_pallas(pred, target, weight, *, force_pallas=False):
    """pred, target: arrays of identical shape (e.g. NCHW). weight: length-2 weights."""
    assert pred.shape == target.shape
    n_elems = int(np.prod(pred.shape))
    w = jnp.asarray(weight, dtype=jnp.float32)

    # Tiny inputs: launch/prologue overhead dominates — let XLA fuse it.
    if n_elems < _PALLAS_MIN_ELEMS and not force_pallas:
        return _loss_joint_xla(pred, target, w)

    gran = max(_row_granularity(pred.dtype), _row_granularity(target.dtype))
    rows = -(-n_elems // _LANES)

    # Split across TensorCores only when each half gets >= 8 full-size tiles
    # (tens of MiB per operand); otherwise the per-core prologue costs more than
    # the parallel DMA saves.
    n_par = 2 if (_num_tensorcores() >= 2 and rows >= 2 * 8 * _MAX_TILE_ROWS) else 1

    rows_per_par = -(-rows // n_par)
    tile_rows = min(_MAX_TILE_ROWS, _round_up(rows_per_par, gran))
    tile_rows = _round_up(tile_rows, gran)
    rows_per_par = _round_up(rows_per_par, tile_rows)
    n_steps = rows_per_par // tile_rows
    rows_padded = rows_per_par * n_par
    padded_elems = rows_padded * _LANES

    pred_flat = pred.reshape(-1)
    target_flat = target.reshape(-1)
    if padded_elems != n_elems:
        # Zero padding contributes 0 to both sum(d^2) and sum(|d|); divide by the
        # true n_elems below.  Divisible (common) shapes skip this copy entirely.
        pad = padded_elems - n_elems
        pred_flat = jnp.pad(pred_flat, (0, pad))
        target_flat = jnp.pad(target_flat, (0, pad))
    pred2d = pred_flat.reshape(rows_padded, _LANES)
    target2d = target_flat.reshape(rows_padded, _LANES)

    def in_map(p, j):
        return (p * n_steps + j, 0)

    dim0_sem = pltpu.CORE_PARALLEL if n_par > 1 else pltpu.ARBITRARY

    sq_parts, abs_parts = pl.pallas_call(
        _joint_loss_kernel,
        out_shape=(
            jax.ShapeDtypeStruct((n_par * _SUBLANES, _LANES), jnp.float32),
            jax.ShapeDtypeStruct((n_par * _SUBLANES, _LANES), jnp.float32),
        ),
        grid_spec=pltpu.PrefetchScalarGridSpec(
            num_scalar_prefetch=0,
            grid=(n_par, n_steps),
            in_specs=[
                pl.BlockSpec((tile_rows, _LANES), in_map),   # pred tile
                pl.BlockSpec((tile_rows, _LANES), in_map),   # target tile
            ],
            out_specs=(
                pl.BlockSpec((_SUBLANES, _LANES), lambda p, j: (p, 0)),
                pl.BlockSpec((_SUBLANES, _LANES), lambda p, j: (p, 0)),
            ),
        ),
        compiler_params=pltpu.CompilerParams(
            dimension_semantics=(dim0_sem, pltpu.ARBITRARY),
            vmem_limit_bytes=_VMEM_LIMIT_BYTES,
        ),
    )(pred2d, target2d)

    # Final (tiny) cross-lane reduce + weighted combine in plain JAX.
    # TODO(synk): for element counts in the billions consider pairwise combining
    # of per-tile partials to limit f32 accumulation drift.
    inv_n = jnp.float32(1.0 / n_elems)
    mse = jnp.sum(sq_parts) * inv_n
    mae = jnp.sum(abs_parts) * inv_n
    return w[0] * mse + w[1] * mae


if __name__ == "__main__":
    key = jax.random.PRNGKey(0)
    k1, k2, k3, k4 = jax.random.split(key, 4)
    weight = jnp.array([0.7, 0.3], dtype=jnp.float32)

    # Case 1: typical NCHW f32 shape, nicely (8,128)-tileable.
    pred = jax.random.normal(k1, (2, 4, 16, 16), dtype=jnp.float32)
    target = jax.random.normal(k2, (2, 4, 16, 16), dtype=jnp.float32)
    out = jax.block_until_ready(loss_joint_pallas(pred, target, weight, force_pallas=True))
    ref = _loss_joint_xla(pred, target, weight)
    assert np.allclose(np.asarray(out), np.asarray(ref), rtol=1e-5, atol=1e-5), (out, ref)

    # Case 2: awkward, non-divisible shape — exercises the zero-pad tail path.
    pred2 = jax.random.normal(k3, (3, 5, 17, 13), dtype=jnp.float32)
    target2 = jax.random.normal(k4, (3, 5, 17, 13), dtype=jnp.float32)
    out2 = jax.block_until_ready(loss_joint_pallas(pred2, target2, weight, force_pallas=True))
    ref2 = _loss_joint_xla(pred2, target2, weight)
    assert np.allclose(np.asarray(out2), np.asarray(ref2), rtol=1e-5, atol=1e-5), (out2, ref2)

    # Case 3: bf16 inputs (half the HBM traffic; f32 accumulation inside the kernel).
    pred_b = pred.astype(jnp.bfloat16)
    target_b = target.astype(jnp.bfloat16)
    out3 = jax.block_until_ready(loss_joint_pallas(pred_b, target_b, weight, force_pallas=True))
    ref3 = _loss_joint_xla(pred_b, target_b, weight)
    assert np.allclose(np.asarray(out3), np.asarray(ref3), rtol=1e-4, atol=1e-4), (out3, ref3)

    print("KERNEL_OK")
</pallas_src>

<mosaic_0001>
module attributes {stable_mosaic.version = 11 : i64} {
  func.func @_joint_loss_kernel(%arg0: i32, %arg1: i32, %arg2: memref<16x128xf32, #tpu.memory_space<vmem>>, %arg3: memref<16x128xf32, #tpu.memory_space<vmem>>, %arg4: memref<8x128xf32, #tpu.memory_space<vmem>>, %arg5: memref<8x128xf32, #tpu.memory_space<vmem>>) attributes {dimension_semantics = [#tpu.dimension_semantics<arbitrary>, #tpu.dimension_semantics<arbitrary>], iteration_bounds = array<i64: 1, 1>, scalar_prefetch = 0 : i64, scratch_operands = 0 : i64, tpu.core_type = #tpu.core_type<tc>, window_params = [{transform_indices = @transform_0, window_bounds = array<i64: 16, 128>}, {transform_indices = @transform_1, window_bounds = array<i64: 16, 128>}, {transform_indices = @transform_2, window_bounds = array<i64: 8, 128>}, {transform_indices = @transform_3, window_bounds = array<i64: 8, 128>}]} {
    %c0_i32 = arith.constant 0 : i32
    %0 = arith.cmpi eq, %arg1, %c0_i32 : i32
    %1 = arith.extui %0 : i1 to i32
    %c0_i32_0 = arith.constant 0 : i32
    %2 = arith.cmpi ne, %1, %c0_i32_0 : i32
    scf.if %2 {
      %cst_13 = arith.constant 0.000000e+00 : f32
      %17 = vector.broadcast %cst_13 : f32 to vector<8x128xf32>
      %c0_14 = arith.constant 0 : index
      %c0_15 = arith.constant 0 : index
      %18 = vector.load %arg4[%c0_14, %c0_15] : memref<8x128xf32, #tpu.memory_space<vmem>>, vector<8x128xf32>
      tpu.vector_store %arg4[%c0_14, %c0_15], %17 {strides = array<i32>} : memref<8x128xf32, #tpu.memory_space<vmem>>, vector<8x128xf32>,
      %cst_16 = arith.constant 0.000000e+00 : f32
      %19 = vector.broadcast %cst_16 : f32 to vector<8x128xf32>
      %c0_17 = arith.constant 0 : index
      %c0_18 = arith.constant 0 : index
      %20 = vector.load %arg5[%c0_17, %c0_18] : memref<8x128xf32, #tpu.memory_space<vmem>>, vector<8x128xf32>
      tpu.vector_store %arg5[%c0_17, %c0_18], %19 {strides = array<i32>} : memref<8x128xf32, #tpu.memory_space<vmem>>, vector<8x128xf32>,
    } else {
    }
    %c0 = arith.constant 0 : index
    %c0_1 = arith.constant 0 : index
    %3 = vector.load %arg2[%c0, %c0_1] : memref<16x128xf32, #tpu.memory_space<vmem>>, vector<16x128xf32>
    %c0_2 = arith.constant 0 : index
    %c0_3 = arith.constant 0 : index
    %4 = vector.load %arg3[%c0_2, %c0_3] : memref<16x128xf32, #tpu.memory_space<vmem>>, vector<16x128xf32>
    %5 = arith.subf %3, %4 : vector<16x128xf32>
    %6 = vector.shape_cast %5 : vector<16x128xf32> to vector<2x8x128xf32>
    %c0_4 = arith.constant 0 : index
    %c0_5 = arith.constant 0 : index
    %7 = vector.load %arg4[%c0_4, %c0_5] : memref<8x128xf32, #tpu.memory_space<vmem>>, vector<8x128xf32>
    %8 = arith.mulf %6, %6 : vector<2x8x128xf32>
    %cst = arith.constant dense<0.000000e+00> : vector<8x128xf32>
    %9 = vector.multi_reduction <add>, %8, %cst [0] : vector<2x8x128xf32> to vector<8x128xf32>
    %10 = arith.addf %7, %9 : vector<8x128xf32>
    %c0_6 = arith.constant 0 : index
    %c0_7 = arith.constant 0 : index
    %11 = vector.load %arg4[%c0_6, %c0_7] : memref<8x128xf32, #tpu.memory_space<vmem>>, vector<8x128xf32>
    tpu.vector_store %arg4[%c0_6, %c0_7], %10 {strides = array<i32>} : memref<8x128xf32, #tpu.memory_space<vmem>>, vector<8x128xf32>,
    %c0_8 = arith.constant 0 : index
    %c0_9 = arith.constant 0 : index
    %12 = vector.load %arg5[%c0_8, %c0_9] : memref<8x128xf32, #tpu.memory_space<vmem>>, vector<8x128xf32>
    %13 = math.absf %6 : vector<2x8x128xf32>
    %cst_10 = arith.constant dense<0.000000e+00> : vector<8x128xf32>
    %14 = vector.multi_reduction <add>, %13, %cst_10 [0] : vector<2x8x128xf32> to vector<8x128xf32>
    %15 = arith.addf %12, %14 : vector<8x128xf32>
    %c0_11 = arith.constant 0 : index
    %c0_12 = arith.constant 0 : index
    %16 = vector.load %arg5[%c0_11, %c0_12] : memref<8x128xf32, #tpu.memory_space<vmem>>, vector<8x128xf32>
    tpu.vector_store %arg5[%c0_11, %c0_12], %15 {strides = array<i32>} : memref<8x128xf32, #tpu.memory_space<vmem>>, vector<8x128xf32>,
    return
  }
  func.func @transform_0(%arg0: i32, %arg1: i32) -> (i32, i32) {
    %c1_i32 = arith.constant 1 : i32
    %0 = arith.muli %arg0, %c1_i32 : i32
    %1 = arith.addi %0, %arg1 : i32
    %c0_i32 = arith.constant 0 : i32
    %c0_i32_0 = arith.constant 0 : i32
    return %1, %c0_i32 : i32, i32
  }
  func.func @transform_1(%arg0: i32, %arg1: i32) -> (i32, i32) {
    %c1_i32 = arith.constant 1 : i32
    %0 = arith.muli %arg0, %c1_i32 : i32
    %1 = arith.addi %0, %arg1 : i32
    %c0_i32 = arith.constant 0 : i32
    %c0_i32_0 = arith.constant 0 : i32
    return %1, %c0_i32 : i32, i32
  }
  func.func @transform_2(%arg0: i32, %arg1: i32) -> (i32, i32) {
    %c0_i32 = arith.constant 0 : i32
    %c0_i32_0 = arith.constant 0 : i32
    return %arg0, %c0_i32 : i32, i32
  }
  func.func @transform_3(%arg0: i32, %arg1: i32) -> (i32, i32) {
    %c0_i32 = arith.constant 0 : i32
    %c0_i32_0 = arith.constant 0 : i32
    return %arg0, %c0_i32 : i32, i32
  }
}

</mosaic_0001>

<llo_original>
// kernel: tpu_custom_call.1
$region0: #{tpu_custom_call.1}
  #allocation0 [shape = 'u32[]', space=smem, size = 0x4, offset = 0x4, fixed_abs, tag = 'smem constant byte address 0x4 - core index']
  #allocation1 [shape = 'u32[144,128]{1,0:T(1,128)}', space=vmem, size = 0x12000, scoped, tag = 'internal scratch']
  %s0 = inlined_call_operand.hbm [shape: f32[16,128], index: 0, kind: input, shape index: {}]
  %s1 = inlined_call_operand.hbm [shape: f32[16,128], index: 1, kind: input, shape index: {}]
  %s2 = inlined_call_operand.hbm [shape: f32[8,128], index: 2, kind: output, shape index: {0}]
  %s3 = inlined_call_operand.hbm [shape: f32[8,128], index: 3, kind: output, shape index: {1}]
  %4 = xla_tuple %s2, %s3
  %s5 = sld [smem:[#allocation0]]
  $region38: #{tpu_custom_call.1} parent=0
    _
  %s7 = ssub.s32 1, %s5
  %s8 = scalar_select 0, %s7, %s5
  $region1: #{tpu_custom_call.1} parent=0
    #allocation2 [shape = 'u8[8192]{0}', space=vmem, size = 0x2000, scoped, tag = 'input window, operand 0, single buffered']
    #allocation3 [shape = 's32[1]{0}', space=sflag, size = 0x4, scoped, tag = 'scoped memory for tpu_custom_call.1']
    #allocation4 [shape = 's32[1]{0}', space=sflag, size = 0x4, scoped, tag = 'scoped memory for tpu_custom_call.1']
    #allocation5 [shape = 'u8[8192]{0}', space=vmem, size = 0x2000, scoped, tag = 'input window, operand 1, single buffered']
    #allocation6 [shape = 's32[1]{0}', space=sflag, size = 0x4, scoped, tag = 'scoped memory for tpu_custom_call.1']
    #allocation7 [shape = 'u8[4096]{0}', space=vmem, size = 0x1000, scoped, tag = 'output window, operand 0, single buffered']
    #allocation8 [shape = 'u8[4096]{0}', space=vmem, size = 0x1000, scoped, tag = 'output window, operand 1, single buffered']
    #allocation9 [shape = 's32[1]{0}', space=sflag, size = 0x4, scoped, tag = 'scoped memory for tpu_custom_call.1']
    %9 = vsyncpa [#allocation3], 0
    %10 = vsyncpa [#allocation6], 0
    %11 = vsyncpa [#allocation4], 0
    %12 = vsyncpa [#allocation9], 0
    // Predicated region
    $region2: #{tpu_custom_call.1} parent=1 // pred_check
      _
    $region3: #{tpu_custom_call.1} parent=1 // pred_check_branch
      %14 = sbr.rel (0) target = $region5
    $region4: #{tpu_custom_call.1} parent=1 // pred_region
      %s15 = sadd.s32 0, 0
      %s16 = smul.u32 2, %s15
      %s18 = ssub.s32 256, 256
      %19 = vsyncadd [#allocation3], %s18
      %s20 = smul.addr %s16, 128
      %s21 = scalar_lea.hbm %s0, %s20
      %s22 = sshll.u32 [#allocation2], 4
      %s23 = int_to_ptr.vmem [resolvable:$true] %s22
      %28 = dma.hbm_to_vmem [thread:$0]  %s21, 256, %s23, [#allocation3], 128, 128, 8
    $region5: #{tpu_custom_call.1} parent=1 // pred_fallthru
      _
    // Predicated region
    $region6: #{tpu_custom_call.1} parent=1 // pred_check
      _
    $region7: #{tpu_custom_call.1} parent=1 // pred_check_branch
      %30 = sbr.rel (0) target = $region9
    $region8: #{tpu_custom_call.1} parent=1 // pred_region
      %s31 = sadd.s32 0, 0
      %s32 = smul.u32 2, %s31
      %s34 = ssub.s32 256, 256
      %35 = vsyncadd [#allocation6], %s34
      %s36 = smul.addr %s32, 128
      %s37 = scalar_lea.hbm %s1, %s36
      %s38 = sshll.u32 [#allocation5], 4
      %s39 = int_to_ptr.vmem [resolvable:$true] %s38
      %44 = dma.hbm_to_vmem [thread:$0]  %s37, 256, %s39, [#allocation6], 128, 128, 8
    $region9: #{tpu_custom_call.1} parent=1 // pred_fallthru
      _
    // Predicated region
    $region10: #{tpu_custom_call.1} parent=1 // pred_check
      _
    $region11: #{tpu_custom_call.1} parent=1 // pred_check_branch
      %46 = sbr.rel (0) target = $region13
    $region12: #{tpu_custom_call.1} parent=1 // pred_region
      %47 = dma.done [#allocation3], 256
    $region13: #{tpu_custom_call.1} parent=1 // pred_fallthru
      _
    // Predicated region
    $region14: #{tpu_custom_call.1} parent=1 // pred_check
      _
    $region15: #{tpu_custom_call.1} parent=1 // pred_check_branch
      %49 = sbr.rel (0) target = $region17
    $region16: #{tpu_custom_call.1} parent=1 // pred_region
      %50 = dma.done [#allocation6], 256
    $region17: #{tpu_custom_call.1} parent=1 // pred_fallthru
      _
    %s51 = sadd.s32 0, 0
    %s52 = smul.u32 2, %s51
    %s53 = sadd.s32 0, 0
    %s54 = smul.u32 2, %s53
    %p55 = scmp.eq.s32.totalorder 0, 0
    // Predicated region
    $region18: #{tpu_custom_call.1} parent=1 // pred_check
      %p56 = pneg %p55
    $region19: #{tpu_custom_call.1} parent=1 // pred_check_branch
      %58 = sbr.rel (%p56) target = $region21
    $region20: #{tpu_custom_call.1} parent=1 // pred_region
      %59 = vst [vmem:[#allocation7] sm:$0xff] 0.0
      %60 = vst [vmem:[#allocation8] sm:$0xff] 0.0
    $region21: #{tpu_custom_call.1} parent=1 // pred_fallthru
      _
    %v61 = vld [vmem:[#allocation2] sm:$0xff]
    %v62 = vld [vmem:[#allocation2 + $0x8] sm:$0xff]
    %v63 = vld [vmem:[#allocation5] sm:$0xff]
    %v64 = vld [vmem:[#allocation5 + $0x8] sm:$0xff]
    %v65 = vsub.f32 %v61, %v63
    %v66 = vsub.f32 %v62, %v64
    %v67 = vld [vmem:[#allocation7] sm:$0xff]
    %v68 = vmul.f32 %v65, %v65
    %v69 = vmul.f32 %v66, %v66
    %v70 = vadd.f32 %v68, %v69
    %v71 = vadd.f32 %v67, %v70
    %72 = vst [vmem:[#allocation7] sm:$0xff] %v71
    %v73 = vld [vmem:[#allocation8] sm:$0xff]
    %v74 = vand.u32 2147483647, %v65
    %v75 = vand.u32 2147483647, %v66
    %v76 = vadd.f32 %v74, %v75
    %v77 = vadd.f32 %v73, %v76
    %78 = vst [vmem:[#allocation8] sm:$0xff] %v77
    // Predicated region
    $region22: #{tpu_custom_call.1} parent=1 // pred_check
      _
    $region23: #{tpu_custom_call.1} parent=1 // pred_check_branch
      %80 = sbr.rel (0) target = $region25
    $region24: #{tpu_custom_call.1} parent=1 // pred_region
      %s82 = ssub.s32 128, 128
      %83 = vsyncadd [#allocation4], %s82
      %s85 = sshll.u32 [#allocation7], 4
      %s86 = int_to_ptr.vmem [resolvable:$true] %s85
      %88 = dma.vmem_to_hbm [thread:$0]  %s86, 128, %s2, [#allocation4]
    $region25: #{tpu_custom_call.1} parent=1 // pred_fallthru
      _
    // Predicated region
    $region26: #{tpu_custom_call.1} parent=1 // pred_check
      _
    $region27: #{tpu_custom_call.1} parent=1 // pred_check_branch
      %90 = sbr.rel (0) target = $region29
    $region28: #{tpu_custom_call.1} parent=1 // pred_region
      %s92 = ssub.s32 128, 128
      %93 = vsyncadd [#allocation9], %s92
      %s95 = sshll.u32 [#allocation8], 4
      %s96 = int_to_ptr.vmem [resolvable:$true] %s95
      %98 = dma.vmem_to_hbm [thread:$0]  %s96, 128, %s3, [#allocation9]
    $region29: #{tpu_custom_call.1} parent=1 // pred_fallthru
      _
    // Predicated region
    $region30: #{tpu_custom_call.1} parent=1 // pred_check
      _
    $region31: #{tpu_custom_call.1} parent=1 // pred_check_branch
      %100 = sbr.rel (0) target = $region33
    $region32: #{tpu_custom_call.1} parent=1 // pred_region
      %101 = dma.done [#allocation4], 128
    $region33: #{tpu_custom_call.1} parent=1 // pred_fallthru
      _
    // Predicated region
    $region34: #{tpu_custom_call.1} parent=1 // pred_check
      _
    $region35: #{tpu_custom_call.1} parent=1 // pred_check_branch
      %103 = sbr.rel (0) target = $region37
    $region36: #{tpu_custom_call.1} parent=1 // pred_region
      %104 = dma.done [#allocation9], 128
    $region37: #{tpu_custom_call.1} parent=1 // pred_fallthru
      _
    %105 = vsyncpa [#allocation3], 1
    %106 = vsyncpa [#allocation6], 1
    %107 = vsyncpa [#allocation4], 1
    %108 = vsyncpa [#allocation9], 1

</llo_original>
